<compile_context>
chip_gen: v6e
topology: v6e:2x2x1
jax: 0.10.0
libtpu: 0.0.40
codegen_flags: <defaults>
</compile_context>

<pallas_src>
import math

import jax
import jax.numpy as jnp
from jax.experimental import pallas as pl
from jax.experimental.pallas import tpu as pltpu


# --------------------------------------------------------------------------- #
# Kernels
# --------------------------------------------------------------------------- #
def _pack_kernel(x_ref, freq_ref, phase_ref, out_ref):
    """Packed path: k batch rows per 128-lane output row.

    x_ref:     (tb, k)      f32 timesteps (k rows per packed row)
    freq_ref:  (1, k*dim)   f32  [freqs|freqs] tiled k times   (VMEM-resident)
    phase_ref: (1, k*dim)   f32  [0..0|pi/2..pi/2] tiled k times
    out_ref:   (tb, k*dim)  out dtype (k*dim == 128 -> unmasked stores)
    """
    tb, k = x_ref.shape
    dim = freq_ref.shape[1] // k
    # Expand x so column j fills lanes [j*dim, (j+1)*dim): k cheap lane
    # broadcasts + one minor-axis concat, done once per tile; the expensive
    # sin pass below then runs fully lane-dense.
    xexp = jnp.concatenate(
        [jnp.broadcast_to(x_ref[:, j:j + 1], (tb, dim)) for j in range(k)],
        axis=-1)                                               # (tb, 128)
    arg = xexp * freq_ref[...] + phase_ref[...]
    out_ref[...] = jnp.sin(arg).astype(out_ref.dtype)


def _split_kernel(x_ref, freq_ref, out_ref):
    """Split path (half % 128 == 0): exact sin/cos, half-width argument build.

    x_ref:    (tb, 1)     f32
    freq_ref: (1, half)   f32 (VMEM-resident)
    out_ref:  (tb, 2*half)
    """
    half = freq_ref.shape[1]
    t = x_ref[...] * freq_ref[...]                             # (tb, half) VPU fma
    out_ref[:, :half] = jnp.sin(t).astype(out_ref.dtype)       # 128-aligned store
    out_ref[:, half:] = jnp.cos(t).astype(out_ref.dtype)       # 128-aligned store


def _fused_kernel(x_ref, freq_ref, phase_ref, out_ref):
    """General fallback: single sin pass via cos(t) = sin(t + pi/2)."""
    arg = x_ref[...] * freq_ref[...] + phase_ref[...]
    out_ref[...] = jnp.sin(arg).astype(out_ref.dtype)


# --------------------------------------------------------------------------- #
# Wrapper
# --------------------------------------------------------------------------- #
def _pick_tile(rows, cap):
    """Row tile: >= 2 grid steps when rows allow it (v7x has 2 TensorCores and
    shards "parallel" axes across them), multiple of 8 sublanes, capped."""
    t = max(8, min(cap, -(-rows // 2)))
    return ((t + 7) // 8) * 8


def sinusoidal_pos_emb(x, dim, *, block_b=1024, out_dtype=jnp.float32):
    """x: (B,) float timesteps -> (B, dim) embedding, matching the PyTorch module."""
    if dim % 2 != 0 or dim <= 2:
        raise ValueError(f"dim must be even and > 2, got dim={dim}")
    B = int(x.shape[0])
    half = dim // 2

    scale = math.log(10000.0) / (half - 1)
    freqs = jnp.exp(jnp.arange(half, dtype=jnp.float32) * (-scale))        # (half,)
    x32 = x.astype(jnp.float32)

    params = pltpu.CompilerParams(dimension_semantics=("parallel",))
    # Keep a single (double-buffered) output tile <= ~4 MiB -> safe under the
    # scoped-VMEM default on every generation (v5e 16 MiB, v7x 32 MiB).
    vmem_cap_rows = max(8, (4 << 20) // max(dim * 4, 1))

    # ---- Path A: lane-dense packing for small dim ------------------------- #
    if dim < 128 and 128 % dim == 0:
        k = 128 // dim
        if B % k == 0:
            R = B // k
            cap = min(max(8, block_b // k), vmem_cap_rows * dim // 128 + 8)
            tb = _pick_tile(R, cap)
            freq_row = jnp.tile(jnp.concatenate([freqs, freqs]), k)[None, :]
            phase_row = jnp.tile(
                jnp.concatenate([jnp.zeros((half,), jnp.float32),
                                 jnp.full((half,), jnp.pi / 2, jnp.float32)]),
                k)[None, :]
            out = pl.pallas_call(
                _pack_kernel,
                out_shape=jax.ShapeDtypeStruct((R, k * dim), out_dtype),
                grid=(pl.cdiv(R, tb),),
                in_specs=[
                    pl.BlockSpec((tb, k), lambda i: (i, 0)),          # x (pipelined)
                    pl.BlockSpec((1, k * dim), lambda i: (0, 0)),     # freq (resident)
                    pl.BlockSpec((1, k * dim), lambda i: (0, 0)),     # phase (resident)
                ],
                out_specs=pl.BlockSpec((tb, k * dim), lambda i: (i, 0)),
                compiler_params=params,
            )(x32.reshape(R, k), freq_row, phase_row)
            return out.reshape(B, dim)       # row-major view, no data movement

    # ---- Path B: split sin/cos over 128-aligned halves (dim >= 256) ------- #
    if half % 128 == 0:
        tb = _pick_tile(B, min(block_b, vmem_cap_rows))
        return pl.pallas_call(
            _split_kernel,
            out_shape=jax.ShapeDtypeStruct((B, dim), out_dtype),
            grid=(pl.cdiv(B, tb),),
            in_specs=[
                pl.BlockSpec((tb, 1), lambda i: (i, 0)),              # x (pipelined)
                pl.BlockSpec((1, half), lambda i: (0, 0)),            # freq (resident)
            ],
            out_specs=pl.BlockSpec((tb, dim), lambda i: (i, 0)),
            compiler_params=params,
        )(x32.reshape(B, 1), freqs[None, :])

    # ---- Path C: general phase-trick fallback ------------------------------ #
    tb = _pick_tile(B, min(block_b, vmem_cap_rows))
    freq_row = jnp.concatenate([freqs, freqs])[None, :]                     # (1, dim)
    phase_row = jnp.concatenate(
        [jnp.zeros((half,), jnp.float32),
         jnp.full((half,), jnp.pi / 2, jnp.float32)])[None, :]              # (1, dim)
    return pl.pallas_call(
        _fused_kernel,
        out_shape=jax.ShapeDtypeStruct((B, dim), out_dtype),
        grid=(pl.cdiv(B, tb),),
        in_specs=[
            pl.BlockSpec((tb, 1), lambda i: (i, 0)),                  # x (pipelined)
            pl.BlockSpec((1, dim), lambda i: (0, 0)),                 # freq (resident)
            pl.BlockSpec((1, dim), lambda i: (0, 0)),                 # phase (resident)
        ],
        out_specs=pl.BlockSpec((tb, dim), lambda i: (i, 0)),
        compiler_params=params,
    )(x32.reshape(B, 1), freq_row, phase_row)


# --------------------------------------------------------------------------- #
# Pure-JAX reference (mirrors the PyTorch forward exactly)
# --------------------------------------------------------------------------- #
def sinusoidal_pos_emb_ref(x, dim):
    half = dim // 2
    emb = math.log(10000.0) / (half - 1)
    emb = jnp.exp(jnp.arange(half, dtype=jnp.float32) * -emb)
    emb = x.astype(jnp.float32)[:, None] * emb[None, :]
    return jnp.concatenate([jnp.sin(emb), jnp.cos(emb)], axis=-1)


if __name__ == "__main__":
    key = jax.random.PRNGKey(0)
    k1, k2, k3, k4 = jax.random.split(key, 4)

    # Case 1: packed path (dim=32 -> k=4, B=8 divisible by 4), realistic
    # diffusion timesteps.  cos is evaluated as sin(t + pi/2); for t up to ~1e3
    # the f32 phase add rounds the argument by ~1e-4, hence the looser atol.
    B, DIM = 8, 32
    x = jax.random.uniform(k1, (B,), dtype=jnp.float32, minval=0.0, maxval=1000.0)
    out = jax.block_until_ready(sinusoidal_pos_emb(x, DIM))
    assert out.shape == (B, DIM), out.shape
    assert jnp.allclose(out, sinusoidal_pos_emb_ref(x, DIM), atol=2e-3, rtol=2e-3), \
        "case1 (packed) mismatch vs reference"

    # Case 2: ragged batch not divisible by the packing factor (B=5, dim=64)
    # -> general fallback path with a partial last block (no pad, no out[:B]
    # slice); small timesteps -> tight tolerance.
    B2, DIM2 = 5, 64
    x2 = jax.random.uniform(k2, (B2,), dtype=jnp.float32, minval=0.0, maxval=10.0)
    out2 = jax.block_until_ready(sinusoidal_pos_emb(x2, DIM2))
    assert out2.shape == (B2, DIM2), out2.shape
    assert jnp.allclose(out2, sinusoidal_pos_emb_ref(x2, DIM2), atol=1e-5, rtol=1e-5), \
        "case2 (fallback, ragged) mismatch vs reference"

    # Case 3: split sin/cos path (dim=256, half=128), 2-step parallel grid
    # (tb=16, B=24 -> partial last block), large timesteps are exact since cos
    # is computed directly (no phase-add rounding).
    B3, DIM3 = 24, 256
    x3 = jax.random.uniform(k3, (B3,), dtype=jnp.float32, minval=0.0, maxval=1000.0)
    out3 = jax.block_until_ready(sinusoidal_pos_emb(x3, DIM3))
    assert out3.shape == (B3, DIM3), out3.shape
    assert jnp.allclose(out3, sinusoidal_pos_emb_ref(x3, DIM3), atol=1e-4, rtol=1e-4), \
        "case3 (split) mismatch vs reference"

    # Case 4: packed path with a multi-step grid (B=96, dim=32, block_b=32 ->
    # 24 packed rows, tile 8 -> grid=(3,)) exercising pipelining with the
    # VMEM-resident freq/phase rows.
    B4, DIM4 = 96, 32
    x4 = jax.random.uniform(k4, (B4,), dtype=jnp.float32, minval=0.0, maxval=10.0)
    out4 = jax.block_until_ready(sinusoidal_pos_emb(x4, DIM4, block_b=32))
    assert out4.shape == (B4, DIM4), out4.shape
    assert jnp.allclose(out4, sinusoidal_pos_emb_ref(x4, DIM4), atol=1e-5, rtol=1e-5), \
        "case4 (packed, multi-step) mismatch vs reference"

    # bf16 output smoke test (compute in f32, cast on the final store only).
    out_bf16 = jax.block_until_ready(
        sinusoidal_pos_emb(x, DIM, out_dtype=jnp.bfloat16))
    assert out_bf16.dtype == jnp.bfloat16 and out_bf16.shape == (B, DIM)
    assert bool(jnp.all(jnp.isfinite(out_bf16.astype(jnp.float32))))

    print("KERNEL_OK")
</pallas_src>

<mosaic_0001>
module attributes {stable_mosaic.version = 11 : i64} {
  func.func @_pack_kernel(%arg0: i32, %arg1: memref<8x4xf32, #tpu.memory_space<vmem>>, %arg2: memref<1x128xf32, #tpu.memory_space<vmem>>, %arg3: memref<1x128xf32, #tpu.memory_space<vmem>>, %arg4: memref<8x128xf32, #tpu.memory_space<vmem>>) attributes {dimension_semantics = [#tpu.dimension_semantics<parallel>], iteration_bounds = array<i64: 1>, scalar_prefetch = 0 : i64, scratch_operands = 0 : i64, tpu.core_type = #tpu.core_type<tc>, window_params = [{transform_indices = @transform_0, window_bounds = array<i64: 8, 4>}, {pipeline_mode = #tpu.pipeline_mode<synchronous>, transform_indices = @transform_1, window_bounds = array<i64: 1, 128>}, {pipeline_mode = #tpu.pipeline_mode<synchronous>, transform_indices = @transform_2, window_bounds = array<i64: 1, 128>}, {transform_indices = @transform_3, window_bounds = array<i64: 8, 128>}]} {
    %c0 = arith.constant 0 : index
    %c0_0 = arith.constant 0 : index
    %0 = vector.load %arg1[%c0, %c0_0] : memref<8x4xf32, #tpu.memory_space<vmem>>, vector<8x1xf32>
    %1 = vector.shape_cast %0 : vector<8x1xf32> to vector<8x1xf32>
    %2 = vector.broadcast %1 : vector<8x1xf32> to vector<8x32xf32>
    %c0_1 = arith.constant 0 : index
    %c1 = arith.constant 1 : index
    %3 = vector.load %arg1[%c0_1, %c1] : memref<8x4xf32, #tpu.memory_space<vmem>>, vector<8x1xf32>
    %4 = vector.shape_cast %3 : vector<8x1xf32> to vector<8x1xf32>
    %5 = vector.broadcast %4 : vector<8x1xf32> to vector<8x32xf32>
    %c0_2 = arith.constant 0 : index
    %c2 = arith.constant 2 : index
    %6 = vector.load %arg1[%c0_2, %c2] : memref<8x4xf32, #tpu.memory_space<vmem>>, vector<8x1xf32>
    %7 = vector.shape_cast %6 : vector<8x1xf32> to vector<8x1xf32>
    %8 = vector.broadcast %7 : vector<8x1xf32> to vector<8x32xf32>
    %c0_3 = arith.constant 0 : index
    %c3 = arith.constant 3 : index
    %9 = vector.load %arg1[%c0_3, %c3] : memref<8x4xf32, #tpu.memory_space<vmem>>, vector<8x1xf32>
    %10 = vector.shape_cast %9 : vector<8x1xf32> to vector<8x1xf32>
    %11 = vector.broadcast %10 : vector<8x1xf32> to vector<8x32xf32>
    %12 = tpu.concatenate %2, %5, %8, %11 in 1 : vector<8x32xf32>, vector<8x32xf32>, vector<8x32xf32>, vector<8x32xf32> -> vector<8x128xf32>
    %c0_4 = arith.constant 0 : index
    %c0_5 = arith.constant 0 : index
    %13 = vector.load %arg2[%c0_4, %c0_5] : memref<1x128xf32, #tpu.memory_space<vmem>>, vector<1x128xf32>
    %14 = vector.broadcast %13 : vector<1x128xf32> to vector<8x128xf32>
    %15 = arith.mulf %12, %14 : vector<8x128xf32>
    %c0_6 = arith.constant 0 : index
    %c0_7 = arith.constant 0 : index
    %16 = vector.load %arg3[%c0_6, %c0_7] : memref<1x128xf32, #tpu.memory_space<vmem>>, vector<1x128xf32>
    %17 = vector.broadcast %16 : vector<1x128xf32> to vector<8x128xf32>
    %18 = arith.addf %15, %17 : vector<8x128xf32>
    %19 = math.sin %18 : vector<8x128xf32>
    %c0_8 = arith.constant 0 : index
    %c0_9 = arith.constant 0 : index
    %20 = vector.load %arg4[%c0_8, %c0_9] : memref<8x128xf32, #tpu.memory_space<vmem>>, vector<8x128xf32>
    tpu.vector_store %arg4[%c0_8, %c0_9], %19 {strides = array<i32>} : memref<8x128xf32, #tpu.memory_space<vmem>>, vector<8x128xf32>,
    return
  }
  func.func @transform_0(%arg0: i32) -> (i32, i32) {
    %c0_i32 = arith.constant 0 : i32
    %c0_i32_0 = arith.constant 0 : i32
    return %arg0, %c0_i32 : i32, i32
  }
  func.func @transform_1(%arg0: i32) -> (i32, i32) {
    %c0_i32 = arith.constant 0 : i32
    %c0_i32_0 = arith.constant 0 : i32
    %c0_i32_1 = arith.constant 0 : i32
    return %c0_i32, %c0_i32_0 : i32, i32
  }
  func.func @transform_2(%arg0: i32) -> (i32, i32) {
    %c0_i32 = arith.constant 0 : i32
    %c0_i32_0 = arith.constant 0 : i32
    %c0_i32_1 = arith.constant 0 : i32
    return %c0_i32, %c0_i32_0 : i32, i32
  }
  func.func @transform_3(%arg0: i32) -> (i32, i32) {
    %c0_i32 = arith.constant 0 : i32
    %c0_i32_0 = arith.constant 0 : i32
    return %arg0, %c0_i32 : i32, i32
  }
}

</mosaic_0001>

<llo_original>
// kernel: tpu_custom_call.1
$region0: #{tpu_custom_call.1}
  #allocation0 [shape = 'u32[]', space=smem, size = 0x4, offset = 0x4, fixed_abs, tag = 'smem constant byte address 0x4 - core index']
  #allocation1 [shape = 'u32[144,128]{1,0:T(1,128)}', space=vmem, size = 0x12000, scoped, tag = 'internal scratch']
  %s0 = inlined_call_operand.hbm [shape: f32[2,4], index: 0, kind: input, shape index: {}]
  %s1 = inlined_call_operand.vmem [shape: f32[1,128], index: 1, kind: input, shape index: {}]
  %s2 = inlined_call_operand.vmem [shape: f32[1,128], index: 2, kind: input, shape index: {}]
  %s3 = inlined_call_operand.hbm [shape: f32[2,128], index: 3, kind: output, shape index: {}]
  %s4 = sld [smem:[#allocation0]]
  $region26: #{tpu_custom_call.1} parent=0
    _
  %s6 = ssub.s32 1, %s4
  %s7 = scalar_select 0, %s6, %s4
  $region1: #{tpu_custom_call.1} parent=0
    #allocation2 [shape = 'u8[4096]{0}', space=vmem, size = 0x1000, scoped, tag = 'input window, operand 0, single buffered']
    #allocation3 [shape = 's32[1]{0}', space=sflag, size = 0x4, scoped, tag = 'scoped memory for tpu_custom_call.1']
    #allocation4 [shape = 's32[1]{0}', space=sflag, size = 0x4, scoped, tag = 'scoped memory for tpu_custom_call.1']
    #allocation5 [shape = 'u8[4096]{0}', space=vmem, size = 0x1000, scoped, tag = 'output window, operand 0, single buffered']
    %8 = vsyncpa [#allocation3], 0
    %9 = vsyncpa [#allocation4], 0
    // Predicated region
    $region2: #{tpu_custom_call.1} parent=1 // pred_check
      _
    $region3: #{tpu_custom_call.1} parent=1 // pred_check_branch
      %11 = sbr.rel (0) target = $region5
    $region4: #{tpu_custom_call.1} parent=1 // pred_region
      %s13 = ssub.s32 128, 32
      %14 = vsyncadd [#allocation3], %s13
      %s15 = sshll.u32 [#allocation2], 4
      %s16 = int_to_ptr.vmem [resolvable:$true] %s15
      %21 = dma.hbm_to_vmem [thread:$0]  %s0, 32, %s16, [#allocation3], 32, 32, 2
    $region5: #{tpu_custom_call.1} parent=1 // pred_fallthru
      _
    // Predicated region
    $region6: #{tpu_custom_call.1} parent=1 // pred_check
      _
    $region7: #{tpu_custom_call.1} parent=1 // pred_check_branch
      %23 = sbr.rel (0) target = $region9
    $region8: #{tpu_custom_call.1} parent=1 // pred_region
      _
    $region9: #{tpu_custom_call.1} parent=1 // pred_fallthru
      _
    // Predicated region
    $region10: #{tpu_custom_call.1} parent=1 // pred_check
      _
    $region11: #{tpu_custom_call.1} parent=1 // pred_check_branch
      %25 = sbr.rel (0) target = $region13
    $region12: #{tpu_custom_call.1} parent=1 // pred_region
      _
    $region13: #{tpu_custom_call.1} parent=1 // pred_fallthru
      _
    // Predicated region
    $region14: #{tpu_custom_call.1} parent=1 // pred_check
      _
    $region15: #{tpu_custom_call.1} parent=1 // pred_check_branch
      %27 = sbr.rel (0) target = $region17
    $region16: #{tpu_custom_call.1} parent=1 // pred_region
      %28 = dma.done [#allocation3], 128
    $region17: #{tpu_custom_call.1} parent=1 // pred_fallthru
      _
    %v29 = vld [vmem:[#allocation2] sm:$0xff]
    %31 = vset.pattern.permute.xlu0 0
    %32 = vperm.xlu0 %31, %v29
    %v33 = vpop.permute.xlu0 %32
    %35 = vset.pattern.permute.xlu0 1
    %36 = vperm.xlu0 %35, %v29
    %v37 = vpop.permute.xlu0 %36
    %39 = vset.pattern.permute.xlu0 2
    %40 = vperm.xlu0 %39, %v29
    %v41 = vpop.permute.xlu0 %40
    %43 = vset.pattern.permute.xlu0 3
    %44 = vperm.xlu0 %43, %v29
    %v45 = vpop.permute.xlu0 %44
    %vm47 = vcmask 261120
    %v48 = vsel %vm47, %v33, %v37
    %vm49 = vcmask 523264
    %v50 = vsel %vm49, %v48, %v41
    %vm51 = vcmask 785408
    %v52 = vsel %vm51, %v50, %v45
    %v53 = vld [vmem:[%s1] sm:$0x1]
    %v55 = vlaneseq
    %v56 = vshrl.u32 %v55, 7
    %v57 = vsub.s32 0, %v56
    %v58 = vrot.slane %v53, %v57
    %v60 = vmul.f32 %v52, %v58
    %v61 = vld [vmem:[%s2] sm:$0x1]
    %v63 = vlaneseq
    %v64 = vshrl.u32 %v63, 7
    %v65 = vsub.s32 0, %v64
    %v66 = vrot.slane %v61, %v65
    %v68 = vadd.f32 %v60, %v66
    %v69 = vand.u32 2147483647, %v68
    %vm70 = vcmp.le.f32.partialorder %v69, 0.7853982
    %vm71 = vcmp.lt.s32.totalorder %v68, 0
    %v72 = vand.u32 %v68, 2139095040
    %v73 = vshrl.u32 %v72, 23
    %v74 = vsub.s32 %v73, 127
    %v75 = vand.u32 2147483647, %v68
    %v76 = vand.u32 %v75, 8388607
    %v77 = vor.u32 %v76, 8388608
    %v78 = vsub.s32 0, %v77
    %v79 = vadd.s32 %v74, 1
    %vm80 = vcmp.gt.s32.totalorder %v79, 0
    %v81 = vsel %vm80, %v79, 0
    %v82 = vshrl.u32 %v81, 5
    %v83 = vand.u32 %v81, 31
    %v84 = vsub.s32 32, %v83
    %v85 = vshrl.u32 683565275, %v84
    %v86 = vshll.u32 683565275, %v83
    %v87 = vshrl.u32 2475754826, %v84
    %v88 = vor.u32 %v86, %v87
    %v89 = vshll.u32 2475754826, %v83
    %v90 = vshrl.u32 2131351028, %v84
    %v91 = vor.u32 %v89, %v90
    %v92 = vshll.u32 2131351028, %v83
    %v93 = vshrl.u32 2102212464, %v84
    %v94 = vor.u32 %v92, %v93
    %v95 = vshll.u32 2102212464, %v83
    %v96 = vshrl.u32 920167782, %v84
    %v97 = vor.u32 %v95, %v96
    %v98 = vshll.u32 920167782, %v83
    %v99 = vshrl.u32 1326507024, %v84
    %v100 = vor.u32 %v98, %v99
    %vm101 = vcmp.lt.s32.totalorder %v82, 1
    %vm102 = vcmp.lt.s32.totalorder %v82, 2
    %vm103 = vcmp.lt.s32.totalorder %v82, 3
    %vm104 = vcmp.lt.s32.totalorder %v82, 4
    %v105 = vsel %vm101, %v85, %v88
    %v106 = vsel %vm104, %v94, 2102212464
    %v107 = vsel %vm103, %v91, %v106
    %v108 = vsel %vm102, %v105, %v107
    %v109 = vsel %vm101, %v88, %v91
    %v110 = vsel %vm104, %v97, 920167782
    %v111 = vsel %vm103, %v94, %v110
    %v112 = vsel %vm102, %v109, %v111
    %v113 = vsel %vm101, %v91, %v94
    %v114 = vsel %vm104, %v100, 1326507024
    %v115 = vsel %vm103, %v97, %v114
    %v116 = vsel %vm102, %v113, %v115
    %v117 = vshll.u32 %v77, 8
    %v118 = vmul.u32.u64.compose %v117, %v116
    %v119 = vextract.low.u32 %v118
    %v120 = vextract.high.u32 %v118
    %v121 = vmul.u32.u64.compose %v117, %v112
    %v122 = vextract.low.u32 %v121
    %v123 = vextract.high.u32 %v121
    %v124 = vmul.u32 %v117, %v108
    %v125 = vadd.s32 %v120, %v122
    %vm126 = vc.u32 %v120, %v122
    %v127 = vadd.s32 %v123, 1
    %v128 = vsel %vm126, %v127, %v123
    %v129 = vadd.s32 %v124, %v128
    %v130 = vadd.s32 %v129, 536870912
    %v131 = vshrl.u32 %v130, 30
    %v132 = vshll.u32 %v131, 30
    %v133 = vsub.s32 %v129, %v132
    %vm134 = vcmp.lt.s32.totalorder %v133, 0
    %v135 = vsub.s32 0, %v133
    %v136 = vsel %vm134, %v135, %v133
    %v137 = vclz %v136
    %v138 = vsub.s32 %v137, 2
    %vm139 = vcmp.gt.s32.totalorder 0, %v138
    %v140 = vsel %vm139, 0, %v138
    %v141 = vsub.s32 32, %v140
    %v142 = vshll.u32 %v133, %v140
    %v143 = vshrl.u32 %v125, %v141
    %v144 = vor.u32 %v142, %v143
    %v145 = vsub.s32 4294967266, %v140
    %v146 = vadd.s32 %v145, 127
    %v147 = vshll.u32 %v146, 23
    %v148 = vor.u32 4788187, %v147
    %v149 = vand.u32 2147483647, %v148
    %v151 = vcvt.s32.f32 %v144
    %v152 = vmul.f32 %v151, %v149
    %v153 = vxor.u32 %v152, 2147483648
    %v154 = vsel %vm71, %v153, %v152
    %v155 = vsub.s32 4, %v131
    %v156 = vsel %vm71, %v155, %v131
    %v157 = vsel %vm70, %v68, %v154
    %v158 = vsel %vm70, 0, %v156
    %v159 = vcosq.f32.pop %v157
    %v160 = vsinq.f32.pop %v157
    %vm161 = vweird.f32 %v68
    %v162 = vadd.s32 %v158, 3
    %v163 = vand.u32 %v162, 3
    %vm164 = vcmp.lt.s32.totalorder %v163, 2
    %vm165 = vcmp.eq.s32.totalorder %v163, 0
    %v166 = vxor.u32 %v160, 2147483648
    %v167 = vsel %vm165, %v159, %v166
    %vm168 = vcmp.eq.s32.totalorder %v163, 2
    %v169 = vxor.u32 %v159, 2147483648
    %v170 = vsel %vm168, %v169, %v160
    %v171 = vsel %vm164, %v167, %v170
    %v172 = vsel %vm161, nan, %v171
    %173 = vst [vmem:[#allocation5] sm:$0xff] %v172
    // Predicated region
    $region18: #{tpu_custom_call.1} parent=1 // pred_check
      _
    $region19: #{tpu_custom_call.1} parent=1 // pred_check_branch
      %175 = sbr.rel (0) target = $region21
    $region20: #{tpu_custom_call.1} parent=1 // pred_region
      %s177 = ssub.s32 128, 32
      %178 = vsyncadd [#allocation4], %s177
      %s179 = sshll.u32 [#allocation5], 4
      %s180 = int_to_ptr.vmem [resolvable:$true] %s179
      %185 = dma.vmem_to_hbm [thread:$0]  %s180, 32, %s3, [#allocation4], 32, 32, 2
    $region21: #{tpu_custom_call.1} parent=1 // pred_fallthru
      _
    // Predicated region
    $region22: #{tpu_custom_call.1} parent=1 // pred_check
      _
    $region23: #{tpu_custom_call.1} parent=1 // pred_check_branch
      %187 = sbr.rel (0) target = $region25
    $region24: #{tpu_custom_call.1} parent=1 // pred_region
      %188 = dma.done [#allocation4], 128
    $region25: #{tpu_custom_call.1} parent=1 // pred_fallthru
      _
    %189 = vsyncpa [#allocation3], 1
    %190 = vsyncpa [#allocation4], 1

</llo_original>
